<compile_context>
chip_gen: v5e
topology: v5e:2x2
jax: 0.10.0
libtpu: 0.0.40
codegen_flags: <defaults>
</compile_context>

<pallas_src>
import functools

import jax
import jax.numpy as jnp
from jax import lax
from jax.experimental import pallas as pl
from jax.experimental.pallas import tpu as pltpu


DEFAULT_TILE_ROWS = 8192          # ~1.6 MiB/tile of f32 pred at C=50
DEFAULT_NUM_CORES = 2             # v7x megacore; cheap no-op on 1-TC chips
_VMEM_LIMIT_BYTES = 32 * 1024 * 1024


def _round_up(x, m):
    return ((x + m - 1) // m) * m


def _pick_tile_rows(n, tile_rows):
    if tile_rows is None:
        tile_rows = DEFAULT_TILE_ROWS
    tile_rows = min(tile_rows, _round_up(n, 128))   # never bigger than padded N
    return _round_up(max(tile_rows, 128), 128)      # lane-dense target blocks


def _nll_loss_kernel(pred_ref, tgt_ref, out_ref, acc_ref, *, inv_n):
    """pred_ref: (tn, C) log-probs (native dtype); tgt_ref: (1, tn) int32 with
    -1 sentinels on padded rows; acc_ref: (1, C) f32 per-class picked sums."""
    ti = pl.program_id(1)

    @pl.when(ti == 0)
    def _init():
        acc_ref[...] = jnp.zeros_like(acc_ref)

    x = pred_ref[...]                               # keep native dtype (bf16 stays bf16)
    # lane-dense target -> column view; sentinel rows (-1) never match a class,
    # so no row-validity iota/mask is needed for full OR partial tiles.
    tgt_col = jnp.transpose(tgt_ref[...])           # (1, tn) -> (tn, 1) int32
    class_ids = lax.broadcasted_iota(jnp.int32, x.shape, 1)
    mask = class_ids == tgt_col                     # (tn, C)
    picked = jnp.where(mask, x, jnp.zeros((), x.dtype))
    acc_ref[...] += jnp.sum(picked.astype(jnp.float32), axis=0, keepdims=True)

    @pl.when(ti == pl.num_programs(1) - 1)
    def _finalize():
        total = jnp.sum(acc_ref[...], axis=1, keepdims=True)      # (1, 1)
        out_ref[...] = jnp.broadcast_to(total * (-inv_n), out_ref.shape)


def _cross_entropy_kernel(logits_ref, tgt_ref, out_ref, acc_pick_ref, acc_lse_ref,
                          *, inv_n):
    """Fused log_softmax + nll_loss (mean): one pass over raw logits."""
    ti = pl.program_id(1)

    @pl.when(ti == 0)
    def _init():
        acc_pick_ref[...] = jnp.zeros_like(acc_pick_ref)
        acc_lse_ref[...] = jnp.zeros_like(acc_lse_ref)

    x = logits_ref[...]                              # (tn, C) native dtype
    tgt_col = jnp.transpose(tgt_ref[...])            # (tn, 1) int32
    valid = tgt_col >= 0                             # row mask straight from sentinel
    class_ids = lax.broadcasted_iota(jnp.int32, x.shape, 1)
    mask = class_ids == tgt_col

    # -log_softmax[r, tgt[r]] = m_r + log(sum_c exp(x_rc - m_r)) - x[r, tgt[r]]
    m = jnp.max(x, axis=1, keepdims=True).astype(jnp.float32)            # lane reduce
    sum_e = jnp.sum(jnp.exp(x.astype(jnp.float32) - m), axis=1, keepdims=True)
    m_lse = jnp.where(valid, m + jnp.log(sum_e), 0.0)                    # (tn, 1)

    # gathered-target term folded into a lane-dense (1, C) accumulator instead
    # of a third per-row lane reduction; sentinel rows contribute 0.
    picked = jnp.where(mask, x, jnp.zeros((), x.dtype))
    acc_pick_ref[...] += jnp.sum(picked.astype(jnp.float32), axis=0, keepdims=True)
    acc_lse_ref[...] += jnp.sum(m_lse, axis=0, keepdims=True)

    @pl.when(ti == pl.num_programs(1) - 1)
    def _finalize():
        total = acc_lse_ref[...] - jnp.sum(acc_pick_ref[...], axis=1, keepdims=True)
        out_ref[...] = jnp.broadcast_to(total * inv_n, out_ref.shape)


def _launch(kernel_body, extra_scratch, pred, target, tile_rows, num_cores):
    n, c = pred.shape
    tn = _pick_tile_rows(n, tile_rows)
    n_tiles = pl.cdiv(n, tn)                         # real pred tiles
    tiles_per_core = pl.cdiv(n_tiles, num_cores)
    n_tiles_padded = tiles_per_core * num_cores
    n_pad = n_tiles_padded * tn
    inv_n = 1.0 / n

    # lane-dense, sentinel-padded targets (shape (1, n_pad)): padded rows and
    # whole phantom tiles select no class and therefore contribute exactly 0.
    tgt = jnp.pad(target.astype(jnp.int32), (0, n_pad - n),
                  constant_values=-1).reshape(1, n_pad)

    def pred_map(ci, ti):
        # clamp phantom tiles (odd tile counts split across cores) onto a real
        # block so the DMA stays in bounds; their sentinel targets zero them out.
        return (jnp.minimum(ci * tiles_per_core + ti, n_tiles - 1), 0)

    def tgt_map(ci, ti):
        return (0, ci * tiles_per_core + ti)

    kernel = functools.partial(kernel_body, inv_n=inv_n)

    out = pl.pallas_call(
        kernel,
        out_shape=jax.ShapeDtypeStruct((num_cores * 8, 128), jnp.float32),
        grid_spec=pltpu.PrefetchScalarGridSpec(
            num_scalar_prefetch=0,
            grid=(num_cores, tiles_per_core),
            in_specs=[
                pl.BlockSpec((tn, c), pred_map),     # pred tile, native dtype DMA
                pl.BlockSpec((1, tn), tgt_map),      # lane-dense int32 targets
            ],
            out_specs=pl.BlockSpec((8, 128), lambda ci, ti: (ci, 0)),
            scratch_shapes=[pltpu.VMEM((1, c), jnp.float32)] + list(extra_scratch),
        ),
        compiler_params=pltpu.CompilerParams(
            dimension_semantics=("parallel", "arbitrary"),
            vmem_limit_bytes=_VMEM_LIMIT_BYTES),
    )(pred, tgt)

    # per-core partials sit at rows 0, 8, 16, ... of the (num_cores*8, 128) slab
    return jnp.sum(out[::8, 0])


def nll_loss(pred, target, *, tile_rows=None, num_cores=DEFAULT_NUM_CORES):
    """F.nll_loss(pred, target) with reduction='mean'.

    pred: (N, C) float log-probabilities (any float dtype, DMA'd as-is);
    target: (N,) integer class ids.
    """
    # TODO(synk): PyTorch's ignore_index / per-class weights are not handled
    # (pcn_partseg's get_loss never passes either).
    return _launch(_nll_loss_kernel, [], pred, target, tile_rows, num_cores)


def cross_entropy_from_logits(logits, target, *, tile_rows=None,
                              num_cores=DEFAULT_NUM_CORES):
    """Fused jax.nn.log_softmax + nll_loss (mean): identical result, one HBM pass."""
    return _launch(_cross_entropy_kernel,
                   [pltpu.VMEM((1, 1), jnp.float32)],
                   logits, target, tile_rows, num_cores)


if __name__ == "__main__":
    key = jax.random.PRNGKey(0)
    k_logits, k_tgt = jax.random.split(key)

    # small partseg-like shapes: 2 clouds x 100 points, num_part = 50 classes
    N, C = 200, 50
    logits = jax.random.normal(k_logits, (N, C), dtype=jnp.float32)
    pred = jax.nn.log_softmax(logits, axis=-1)
    target = jax.random.randint(k_tgt, (N,), 0, C, dtype=jnp.int32)

    ref = -jnp.mean(pred[jnp.arange(N), target])

    # 1) module-equivalent kernel, small tiles: grid (2 cores x 1 tile each),
    #    last tile partial -> exercises the sentinel-masked padded rows.
    loss = nll_loss(pred, target, tile_rows=64)
    jax.block_until_ready(loss)
    assert jnp.allclose(loss, ref, atol=1e-5, rtol=1e-5), (loss, ref)

    # 2) default tile size: single real tile; core 1 gets a clamped phantom
    #    (all-sentinel) tile and must contribute exactly 0.
    loss_d = nll_loss(pred, target)
    jax.block_until_ready(loss_d)
    assert jnp.allclose(loss_d, ref, atol=1e-5, rtol=1e-5), (loss_d, ref)

    # 3) fused logits -> loss kernel (skips the (N, C) log-prob HBM round trip)
    loss_f = cross_entropy_from_logits(logits, target, tile_rows=64)
    jax.block_until_ready(loss_f)
    assert jnp.allclose(loss_f, ref, atol=1e-5, rtol=1e-5), (loss_f, ref)

    print("KERNEL_OK")
</pallas_src>

<mosaic_0001>
module attributes {stable_mosaic.version = 11 : i64} {
  func.func @_nll_loss_kernel(%arg0: i32, %arg1: i32, %arg2: memref<128x50xf32, #tpu.memory_space<vmem>>, %arg3: memref<1x128xi32, #tpu.memory_space<vmem>>, %arg4: memref<8x128xf32, #tpu.memory_space<vmem>>, %arg5: memref<1x50xf32, #tpu.memory_space<vmem>>) attributes {dimension_semantics = [#tpu.dimension_semantics<parallel>, #tpu.dimension_semantics<arbitrary>], iteration_bounds = array<i64: 2, 1>, scalar_prefetch = 0 : i64, scratch_operands = 1 : i64, tpu.core_type = #tpu.core_type<tc>, window_params = [{transform_indices = @transform_0, window_bounds = array<i64: 128, 50>}, {transform_indices = @transform_1, window_bounds = array<i64: 1, 128>}, {transform_indices = @transform_2, window_bounds = array<i64: 8, 128>}]} {
    %c0_i32 = arith.constant 0 : i32
    %0 = arith.cmpi eq, %arg1, %c0_i32 : i32
    %1 = arith.extui %0 : i1 to i32
    %c0_i32_0 = arith.constant 0 : i32
    %2 = arith.cmpi ne, %1, %c0_i32_0 : i32
    scf.if %2 {
      %cst_11 = arith.constant 0.000000e+00 : f32
      %19 = vector.broadcast %cst_11 : f32 to vector<1x50xf32>
      %c0_12 = arith.constant 0 : index
      %c0_13 = arith.constant 0 : index
      %20 = vector.load %arg5[%c0_12, %c0_13] : memref<1x50xf32, #tpu.memory_space<vmem>>, vector<1x50xf32>
      tpu.vector_store %arg5[%c0_12, %c0_13], %19 {strides = array<i32>} : memref<1x50xf32, #tpu.memory_space<vmem>>, vector<1x50xf32>,
    } else {
    }
    %c0 = arith.constant 0 : index
    %c0_1 = arith.constant 0 : index
    %3 = vector.load %arg2[%c0, %c0_1] : memref<128x50xf32, #tpu.memory_space<vmem>>, vector<128x50xf32>
    %c0_2 = arith.constant 0 : index
    %c0_3 = arith.constant 0 : index
    %4 = vector.load %arg3[%c0_2, %c0_3] : memref<1x128xi32, #tpu.memory_space<vmem>>, vector<1x128xi32>
    %5 = tpu.transpose %4, [1, 0] : vector<1x128xi32> -> vector<128x1xi32>
    %6 = tpu.iota {dimensions = array<i32: 1>} : vector<128x50xi32>
    %7 = vector.broadcast %5 : vector<128x1xi32> to vector<128x50xi32>
    %8 = arith.cmpi eq, %6, %7 : vector<128x50xi32>
    %cst = arith.constant 0.000000e+00 : f32
    %9 = vector.broadcast %cst : f32 to vector<128x50xf32>
    %10 = arith.select %8, %3, %9 : vector<128x50xi1>, vector<128x50xf32>
    %c0_4 = arith.constant 0 : index
    %c0_5 = arith.constant 0 : index
    %11 = vector.load %arg5[%c0_4, %c0_5] : memref<1x50xf32, #tpu.memory_space<vmem>>, vector<1x50xf32>
    %cst_6 = arith.constant dense<0.000000e+00> : vector<50xf32>
    %12 = vector.multi_reduction <add>, %10, %cst_6 [0] : vector<128x50xf32> to vector<50xf32>
    %13 = vector.shape_cast %12 : vector<50xf32> to vector<1x50xf32>
    %14 = arith.addf %11, %13 : vector<1x50xf32>
    %c0_7 = arith.constant 0 : index
    %c0_8 = arith.constant 0 : index
    %15 = vector.load %arg5[%c0_7, %c0_8] : memref<1x50xf32, #tpu.memory_space<vmem>>, vector<1x50xf32>
    tpu.vector_store %arg5[%c0_7, %c0_8], %14 {strides = array<i32>} : memref<1x50xf32, #tpu.memory_space<vmem>>, vector<1x50xf32>,
    %c0_i32_9 = arith.constant 0 : i32
    %16 = arith.cmpi eq, %arg1, %c0_i32_9 : i32
    %17 = arith.extui %16 : i1 to i32
    %c0_i32_10 = arith.constant 0 : i32
    %18 = arith.cmpi ne, %17, %c0_i32_10 : i32
    scf.if %18 {
      %c0_11 = arith.constant 0 : index
      %c0_12 = arith.constant 0 : index
      %19 = vector.load %arg5[%c0_11, %c0_12] : memref<1x50xf32, #tpu.memory_space<vmem>>, vector<1x50xf32>
      %cst_13 = arith.constant dense<0.000000e+00> : vector<1xf32>
      %20 = vector.multi_reduction <add>, %19, %cst_13 [1] : vector<1x50xf32> to vector<1xf32>
      %21 = vector.shape_cast %20 : vector<1xf32> to vector<1x1xf32>
      %cst_14 = arith.constant -5.000000e-03 : f32
      %22 = vector.broadcast %cst_14 : f32 to vector<1x1xf32>
      %23 = arith.mulf %21, %22 : vector<1x1xf32>
      %24 = vector.shape_cast %23 : vector<1x1xf32> to vector<1x1xf32>
      %25 = vector.broadcast %24 : vector<1x1xf32> to vector<8x128xf32>
      %c0_15 = arith.constant 0 : index
      %c0_16 = arith.constant 0 : index
      %26 = vector.load %arg4[%c0_15, %c0_16] : memref<8x128xf32, #tpu.memory_space<vmem>>, vector<8x128xf32>
      tpu.vector_store %arg4[%c0_15, %c0_16], %25 {strides = array<i32>} : memref<8x128xf32, #tpu.memory_space<vmem>>, vector<8x128xf32>,
    } else {
    }
    return
  }
  func.func @transform_0(%arg0: i32, %arg1: i32) -> (i32, i32) {
    %c1_i32 = arith.constant 1 : i32
    %0 = arith.muli %arg0, %c1_i32 : i32
    %1 = arith.addi %0, %arg1 : i32
    %c1_i32_0 = arith.constant 1 : i32
    %2 = arith.minsi %1, %c1_i32_0 : i32
    %c0_i32 = arith.constant 0 : i32
    %c0_i32_1 = arith.constant 0 : i32
    return %2, %c0_i32 : i32, i32
  }
  func.func @transform_1(%arg0: i32, %arg1: i32) -> (i32, i32) {
    %c1_i32 = arith.constant 1 : i32
    %0 = arith.muli %arg0, %c1_i32 : i32
    %1 = arith.addi %0, %arg1 : i32
    %c0_i32 = arith.constant 0 : i32
    %c0_i32_0 = arith.constant 0 : i32
    return %c0_i32, %1 : i32, i32
  }
  func.func @transform_2(%arg0: i32, %arg1: i32) -> (i32, i32) {
    %c0_i32 = arith.constant 0 : i32
    %c0_i32_0 = arith.constant 0 : i32
    return %arg0, %c0_i32 : i32, i32
  }
}

</mosaic_0001>

<llo_original>
// kernel: tpu_custom_call.1
$region0: #{tpu_custom_call.1}
  #allocation0 [shape = 'u32[]', space=smem, size = 0x4, offset = 0x4, fixed_abs, tag = 'smem constant byte address 0x4 - core index']
  #allocation1 [shape = 'u32[72,128]{1,0:T(1,128)}', space=vmem, size = 0x9000, scoped, tag = 'internal scratch']
  #allocation2 [shape = 'f32[1,50]{1,0:T(1,128)}', space=vmem, size = 0x200, scoped, tag = 'scratch operand']
  %s0 = inlined_call_operand.vmem [shape: f32[200,50], index: 0, kind: input, shape index: {}]
  %s1 = inlined_call_operand.vmem [shape: s32[1,256], index: 1, kind: input, shape index: {}]
  %s2 = inlined_call_operand.hbm [shape: f32[16,128], index: 2, kind: output, shape index: {}]
  %s3 = sld [smem:[#allocation0]]
  $region49: #{tpu_custom_call.1} parent=0
    _
  %s5 = ssub.s32 1, %s3
  %s6 = scalar_select 0, %s5, %s3
  $region1: #{tpu_custom_call.1} parent=0
    #allocation3 [shape = 'u8[8192]{0}', space=vmem, size = 0x2000, scoped, tag = 'output window, operand 0']
    #allocation4 [shape = 's32[2]{0}', space=sflag, size = 0x8, scoped, tag = 'scoped memory for tpu_custom_call.1']
    %7 = vsyncpa [#allocation4], 0
    %s8 = scalar_lea.sflag [#allocation4], 1
    %9 = vsyncpa %s8, 0
    loop: start=0, step=1, limit=4
    $region2: #{tpu_custom_call.1} parent=1 // loop_pre_header
      _
    $region3: #{tpu_custom_call.1} parent=1 // loop_header
      %s11 = sphi 0, %s15
      %p12 = scmp.ge.s32.totalorder %s11, 4
      %s18 = sphi 0, %s30
      %s19 = sphi 0, %s26
      %s20 = sphi 0, %s18
      %s21 = sphi 0, %s19
      %s22 = sphi 0, %s20
      %s23 = sphi 0, %s21
      %s39 = sphi 0, %s41
      %s42 = sphi 0, %s39
      %s43 = sphi 0, %s42
      %s59 = sphi 0, %s43
      %s67 = sphi 0, %s69
      %s70 = sphi 0, %s67
      %s71 = sphi 0, %s70
      %s87 = sphi 0, %s71
      %s93 = sphi 0, %s95
      %s96 = sphi 0, %s93
      %s97 = sphi 0, %s96
      %s113 = sphi 0, %s97
    $region4: #{tpu_custom_call.1} parent=1 // loop_header_branch
      %14 = sbr.rel (%p12) target = $region8
    $region5: #{tpu_custom_call.1} parent=1 // loop_body
      %s16 = ssub.s32 %s11, 1
      %s17 = ssub.s32 %s11, 2
      %s24 = sadd.s32 1, %s19
      %p25 = scmp.ge.s32.totalorder %s24, 1
      %s26 = scalar_select %p25, 0, %s24
      %s27 = sadd.s32 1, %s18
      %s28 = scalar_select %p25, %s27, %s18
      %p29 = scmp.ge.s32.totalorder %s28, 2
      %s30 = scalar_select %p29, 0, %s28
      %s31 = sadd.s32 %s18, %s19
      %p32 = scmp.lt.s32.totalorder %s31, 1
      %s33 = scalar_select %p32, %s31, 1
      %s34 = sadd.s32 %s30, %s26
      %p35 = scmp.lt.s32.totalorder %s34, 1
      %s36 = scalar_select %p35, %s34, 1
      %s37 = ssub.s32 %s33, %s36
      %p38 = scmp.eq.s32.totalorder %s37, 0
      %s40 = sadd.s32 %s39, 1
      %s41 = scalar_select %p38, %s39, %s40
      %p44 = pneg %p38
      %p45 = scmp.eq.s32.totalorder %s11, 1
      %p46 = por %p44, %p45
      %p47 = scmp.ne.s32.totalorder %s39, %s42
      %p48 = scmp.eq.s32.totalorder %s11, 0
      %p49 = por %p47, %p48
      %p50 = scmp.ne.s32.totalorder %s39, %s42
      %p51 = scmp.eq.s32.totalorder %s16, 1
      %p52 = por %p50, %p51
      %p53 = scmp.ne.s32.totalorder %s42, %s43
      %p54 = scmp.eq.s32.totalorder %s16, 0
      %p55 = por %p53, %p54
      %p56 = scmp.ne.s32.totalorder %s42, %s43
      %p57 = scmp.eq.s32.totalorder %s17, 1
      %p58 = por %p56, %p57
      %p60 = scmp.ne.s32.totalorder %s43, %s59
      %p61 = scmp.eq.s32.totalorder %s17, 0
      %p62 = por %p60, %p61
      %s63 = sadd.s32 %s18, %s19
      %s64 = sadd.s32 %s30, %s26
      %s65 = ssub.s32 %s63, %s64
      %p66 = scmp.eq.s32.totalorder %s65, 0
      %s68 = sadd.s32 %s67, 1
      %s69 = scalar_select %p66, %s67, %s68
      %p72 = pneg %p66
      %p73 = scmp.eq.s32.totalorder %s11, 1
      %p74 = por %p72, %p73
      %p75 = scmp.ne.s32.totalorder %s67, %s70
      %p76 = scmp.eq.s32.totalorder %s11, 0
      %p77 = por %p75, %p76
      %p78 = scmp.ne.s32.totalorder %s67, %s70
      %p79 = scmp.eq.s32.totalorder %s16, 1
      %p80 = por %p78, %p79
      %p81 = scmp.ne.s32.totalorder %s70, %s71
      %p82 = scmp.eq.s32.totalorder %s16, 0
      %p83 = por %p81, %p82
      %p84 = scmp.ne.s32.totalorder %s70, %s71
      %p85 = scmp.eq.s32.totalorder %s17, 1
      %p86 = por %p84, %p85
      %p88 = scmp.ne.s32.totalorder %s71, %s87
      %p89 = scmp.eq.s32.totalorder %s17, 0
      %p90 = por %p88, %p89
      %s91 = ssub.s32 %s18, %s30
      %p92 = scmp.eq.s32.totalorder %s91, 0
      %s94 = sadd.s32 %s93, 1
      %s95 = scalar_select %p92, %s93, %s94
      %p98 = pneg %p92
      %p99 = scmp.eq.s32.totalorder %s11, 1
      %p100 = por %p98, %p99
      %p101 = scmp.ne.s32.totalorder %s93, %s96
      %p102 = scmp.eq.s32.totalorder %s11, 0
      %p103 = por %p101, %p102
      %p104 = scmp.ne.s32.totalorder %s93, %s96
      %p105 = scmp.eq.s32.totalorder %s16, 1
      %p106 = por %p104, %p105
      %p107 = scmp.ne.s32.totalorder %s96, %s97
      %p108 = scmp.eq.s32.totalorder %s16, 0
      %p109 = por %p107, %p108
      %p110 = scmp.ne.s32.totalorder %s96, %s97
      %p111 = scmp.eq.s32.totalorder %s17, 1
      %p112 = por %p110, %p111
      %p114 = scmp.ne.s32.totalorder %s97, %s113
      %p115 = scmp.eq.s32.totalorder %s17, 0
      %p116 = por %p114, %p115
      %p117 = scmp.le.s32.totalorder 1, %s11
      %p118 = scmp.lt.s32.totalorder %s11, 3
      %p119 = pnand %p117, %p118
      %p120 = pneg %p119
      // Predicated region
      $region9: #{tpu_custom_call.1} parent=5 // pred_check
        _
      $region10: #{tpu_custom_call.1} parent=5 // pred_check_branch
        %122 = sbr.rel (%p119) target = $region12
      $region11: #{tpu_custom_call.1} parent=5 // pred_region
        %s123 = ssub.s32 %s11, 1
      $region12: #{tpu_custom_call.1} parent=5 // pred_fallthru
        _
      %p124 = scmp.lt.s32.totalorder %s11, 2
      // Predicated region
      $region13: #{tpu_custom_call.1} parent=5 // pred_check
        %p125 = pneg %p124
      $region14: #{tpu_custom_call.1} parent=5 // pred_check_branch
        %127 = sbr.rel (%p125) target = $region16
      $region15: #{tpu_custom_call.1} parent=5 // pred_region
        // Predicated region
        $region17: #{tpu_custom_call.1} parent=15 // pred_check
          %p128 = pneg %p49
        $region18: #{tpu_custom_call.1} parent=15 // pred_check_branch
          %130 = sbr.rel (%p128) target = $region20
        $region19: #{tpu_custom_call.1} parent=15 // pred_region
          %s131 = sadd.s32 %s18, %s19
          %p132 = scmp.lt.s32.totalorder %s131, 1
          %s133 = scalar_select %p132, %s131, 1
          %s134 = smul.u32 16, %s133
          %s135 = ssub.s32 25, %s134
          %p136 = scmp.lt.s32.totalorder %s135, 16
          %s137 = scalar_select %p136, %s135, 16
          %s138 = smul.u32 8, %s137
          %p139 = scmp.lt.s32.totalorder %s134, 24
          %s140 = scalar_select %p139, %s134, 24
          %s141 = smul.addr %s140, 8
          %s142 = scalar_lea.vmem %s0, %s141
          %s143 = sadd.s32 %s18, %s19
          %p144 = scmp.lt.s32.totalorder %s143, 1
          %s145 = scalar_select %p144, %s143, 1
          %s146 = smul.u32 16, %s145
          %s147 = ssub.s32 25, %s146
          %p148 = scmp.lt.s32.totalorder %s147, 16
          %s149 = scalar_select %p148, %s147, 16
          %s150 = smul.u32 8, %s149
        $region20: #{tpu_custom_call.1} parent=15 // pred_fallthru
          _
        // Predicated region
        $region21: #{tpu_custom_call.1} parent=15 // pred_check
          %p151 = pneg %p77
        $region22: #{tpu_custom_call.1} parent=15 // pred_check_branch
          %153 = sbr.rel (%p151) target = $region24
        $region23: #{tpu_custom_call.1} parent=15 // pred_region
          %s154 = sadd.s32 %s18, %s19
          %p155 = scmp.lt.s32.totalorder %s154, 1
          %s156 = scalar_select %p155, %s154, 1
          %s157 = scalar_lea.vmem %s1, %s156
          %s158 = sadd.s32 %s18, %s19
        $region24: #{tpu_custom_call.1} parent=15 // pred_fallthru
          _
      $region16: #{tpu_custom_call.1} parent=5 // pred_fallthru
        _
      %p159 = scmp.le.s32.totalorder 1, %s11
      %p160 = scmp.lt.s32.totalorder %s11, 3
      %p161 = pnand %p159, %p160
      %p162 = pneg %p161
      // Predicated region
      $region25: #{tpu_custom_call.1} parent=5 // pred_check
        _
      $region26: #{tpu_custom_call.1} parent=5 // pred_check_branch
        %164 = sbr.rel (%p161) target = $region28
      $region27: #{tpu_custom_call.1} parent=5 // pred_region
        %s165 = ssub.s32 %s11, 1
        %s166 = sadd.s32 %s20, %s21
        %p167 = scmp.lt.s32.totalorder %s166, 1
        %s168 = scalar_select %p167, %s166, 1
        %s169 = smul.u32 16, %s168
        %s170 = ssub.s32 25, %s169
        %p171 = scmp.lt.s32.totalorder %s170, 16
        %s172 = scalar_select %p171, %s170, 16
        %s173 = smul.u32 8, %s172
        %p174 = scmp.lt.s32.totalorder %s169, 24
        %s175 = scalar_select %p174, %s169, 24
        %s176 = smul.addr %s175, 8
        %s177 = scalar_lea.vmem %s0, %s176
        %p178 = pneg %p55
        %p179 = pneg %p52
        %s180 = sadd.s32 %s20, %s21
        %p181 = scmp.lt.s32.totalorder %s180, 1
        %s182 = scalar_select %p181, %s180, 1
        %s183 = scalar_lea.vmem %s1, %s182
        %p184 = pneg %p83
        %p185 = pneg %p80
        %p186 = pneg %p109
        %p187 = pneg %p106
        %s188 = sand.u32 %s96, 1
        %s189 = scalar_lea.sflag [#allocation4], %s188
        %s190 = sand.u32 %s96, 1
        %s191 = smul.addr %s190, 8
        %s192 = scalar_lea.vmem [#allocation3], %s191
        %s193 = sadd.s32 %s20, %s21
        %p194 = scmp.lt.s32.totalorder %s193, 1
        %s195 = scalar_select %p194, %s193, 1
        %s196 = smul.u32 16, %s195
        %s197 = ssub.s32 25, %s196
        %p198 = scmp.lt.s32.totalorder %s197, 16
        %s199 = scalar_select %p198, %s197, 16
        %s200 = smul.u32 8, %s199
        %p201 = scmp.lt.s32.totalorder %s196, 24
        %s202 = scalar_select %p201, %s196, 24
        %s203 = smul.addr %s202, 8
        %s204 = scalar_lea.vmem %s0, %s203
        %s205 = sadd.s32 %s20, %s21
        %p206 = scmp.lt.s32.totalorder %s205, 1
        %s207 = scalar_select %p206, %s205, 1
        %s208 = smul.u32 16, %s207
        %s209 = ssub.s32 25, %s208
        %p210 = scmp.lt.s32.totalorder %s209, 16
        %s211 = scalar_select %p210, %s209, 16
        %s212 = smul.u32 8, %s211
        %s213 = sadd.s32 %s20, %s21
        %p214 = scmp.lt.s32.totalorder %s213, 1
        %s215 = scalar_select %p214, %s213, 1
        %s216 = scalar_lea.vmem %s1, %s215
        %s217 = sadd.s32 %s20, %s21
        %p218 = scmp.eq.s32.totalorder %s21, 0
        // Predicated region
        $region29: #{tpu_custom_call.1} parent=27 // pred_check
          %p219 = pneg %p218
        $region30: #{tpu_custom_call.1} parent=27 // pred_check_branch
          %221 = sbr.rel (%p219) target = $region32
        $region31: #{tpu_custom_call.1} parent=27 // pred_region
          %vm222 = vcmask 401408
          %223 = vst.msk [vmem:[#allocation2] sm:$0x1] %vm222, 0.0
        $region32: #{tpu_custom_call.1} parent=27 // pred_fallthru
          _
        %v224 = vld [vmem:[%s204] sm:$0xff]
        %v225 = vld [vmem:[%s204 + $0x8] sm:$0xff]
        %v226 = vld [vmem:[%s204 + $0x10] sm:$0xff]
        %v227 = vld [vmem:[%s204 + $0x18] sm:$0xff]
        %v228 = vld [vmem:[%s204 + $0x20] sm:$0xff]
        %v229 = vld [vmem:[%s204 + $0x28] sm:$0xff]
        %v230 = vld [vmem:[%s204 + $0x30] sm:$0xff]
        %v231 = vld [vmem:[%s204 + $0x38] sm:$0xff]
        %v232 = vld [vmem:[%s204 + $0x40] sm:$0xff]
        %v233 = vld [vmem:[%s204 + $0x48] sm:$0xff]
        %v234 = vld [vmem:[%s204 + $0x50] sm:$0xff]
        %v235 = vld [vmem:[%s204 + $0x58] sm:$0xff]
        %v236 = vld [vmem:[%s204 + $0x60] sm:$0xff]
        %v237 = vld [vmem:[%s204 + $0x68] sm:$0xff]
        %v238 = vld [vmem:[%s204 + $0x70] sm:$0xff]
        %v239 = vld [vmem:[%s204 + $0x78] sm:$0xff]
        %v240 = vld [vmem:[%s216] sm:$0x1]
        %241 = vxpose.xlu0.b32.start [1/16] %v240, 128
        %242 = vxpose.xlu0.b32.cont [2/16] 0, 128
        %243 = vxpose.xlu0.b32.cont [3/16] 0, 128
        %244 = vxpose.xlu0.b32.cont [4/16] 0, 128
        %245 = vxpose.xlu0.b32.cont [5/16] 0, 128
        %246 = vxpose.xlu0.b32.cont [6/16] 0, 128
        %247 = vxpose.xlu0.b32.cont [7/16] 0, 128
        %248 = vxpose.xlu0.b32.cont [8/16] 0, 128
        %249 = vxpose.xlu0.b32.cont [9/16] 0, 128
        %250 = vxpose.xlu0.b32.cont [10/16] 0, 128
        %251 = vxpose.xlu0.b32.cont [11/16] 0, 128
        %252 = vxpose.xlu0.b32.cont [12/16] 0, 128
        %253 = vxpose.xlu0.b32.cont [13/16] 0, 128
        %254 = vxpose.xlu0.b32.cont [14/16] 0, 128
        %255 = vxpose.xlu0.b32.cont [15/16] 0, 128
        %256 = vxpose.xlu0.b32.end [16/16] 0, 128
        %v257 = vpop.trf.xlu0
        %v258 = vpop.trf.xlu0
        %v259 = vpop.trf.xlu0
        %v260 = vpop.trf.xlu0
        %v261 = vpop.trf.xlu0
        %v262 = vpop.trf.xlu0
        %v263 = vpop.trf.xlu0
        %v264 = vpop.trf.xlu0
        %v265 = vpop.trf.xlu0
        %v266 = vpop.trf.xlu0
        %v267 = vpop.trf.xlu0
        %v268 = vpop.trf.xlu0
        %v269 = vpop.trf.xlu0
        %v270 = vpop.trf.xlu0
        %v271 = vpop.trf.xlu0
        %v272 = vpop.trf.xlu0
        %v273 = vlaneseq
        %v274 = vand.u32 %v273, 127
        %275 = vset.pattern.permute.xlu0 0
        %276 = vperm.xlu0 %275, %v257
        %v277 = vpop.permute.xlu0 %276
        %278 = vset.pattern.permute.xlu0 0
        %279 = vperm.xlu0 %278, %v258
        %v280 = vpop.permute.xlu0 %279
        %281 = vset.pattern.permute.xlu0 0
        %282 = vperm.xlu0 %281, %v259
        %v283 = vpop.permute.xlu0 %282
        %284 = vset.pattern.permute.xlu0 0
        %285 = vperm.xlu0 %284, %v260
        %v286 = vpop.permute.xlu0 %285
        %287 = vset.pattern.permute.xlu0 0
        %288 = vperm.xlu0 %287, %v261
        %v289 = vpop.permute.xlu0 %288
        %290 = vset.pattern.permute.xlu0 0
        %291 = vperm.xlu0 %290, %v262
        %v292 = vpop.permute.xlu0 %291
        %293 = vset.pattern.permute.xlu0 0
        %294 = vperm.xlu0 %293, %v263
        %v295 = vpop.permute.xlu0 %294
        %296 = vset.pattern.permute.xlu0 0
        %297 = vperm.xlu0 %296, %v264
        %v298 = vpop.permute.xlu0 %297
        %299 = vset.pattern.permute.xlu0 0
        %300 = vperm.xlu0 %299, %v265
        %v301 = vpop.permute.xlu0 %300
        %302 = vset.pattern.permute.xlu0 0
        %303 = vperm.xlu0 %302, %v266
        %v304 = vpop.permute.xlu0 %303
        %305 = vset.pattern.permute.xlu0 0
        %306 = vperm.xlu0 %305, %v267
        %v307 = vpop.permute.xlu0 %306
        %308 = vset.pattern.permute.xlu0 0
        %309 = vperm.xlu0 %308, %v268
        %v310 = vpop.permute.xlu0 %309
        %311 = vset.pattern.permute.xlu0 0
        %312 = vperm.xlu0 %311, %v269
        %v313 = vpop.permute.xlu0 %312
        %314 = vset.pattern.permute.xlu0 0
        %315 = vperm.xlu0 %314, %v270
        %v316 = vpop.permute.xlu0 %315
        %317 = vset.pattern.permute.xlu0 0
        %318 = vperm.xlu0 %317, %v271
        %v319 = vpop.permute.xlu0 %318
        %320 = vset.pattern.permute.xlu0 0
        %321 = vperm.xlu0 %320, %v272
        %v322 = vpop.permute.xlu0 %321
        %vm323 = vcmp.eq.s32.totalorder %v274, %v277
        %vm324 = vcmp.eq.s32.totalorder %v274, %v280
        %vm325 = vcmp.eq.s32.totalorder %v274, %v283
        %vm326 = vcmp.eq.s32.totalorder %v274, %v286
        %vm327 = vcmp.eq.s32.totalorder %v274, %v289
        %vm328 = vcmp.eq.s32.totalorder %v274, %v292
        %vm329 = vcmp.eq.s32.totalorder %v274, %v295
        %vm330 = vcmp.eq.s32.totalorder %v274, %v298
        %vm331 = vcmp.eq.s32.totalorder %v274, %v301
        %vm332 = vcmp.eq.s32.totalorder %v274, %v304
        %vm333 = vcmp.eq.s32.totalorder %v274, %v307
        %vm334 = vcmp.eq.s32.totalorder %v274, %v310
        %vm335 = vcmp.eq.s32.totalorder %v274, %v313
        %vm336 = vcmp.eq.s32.totalorder %v274, %v316
        %vm337 = vcmp.eq.s32.totalorder %v274, %v319
        %vm338 = vcmp.eq.s32.totalorder %v274, %v322
        %v339 = vsel %vm323, %v224, 0.0
        %v340 = vsel %vm324, %v225, 0.0
        %v341 = vsel %vm325, %v226, 0.0
        %v342 = vsel %vm326, %v227, 0.0
        %v343 = vsel %vm327, %v228, 0.0
        %v344 = vsel %vm328, %v229, 0.0
        %v345 = vsel %vm329, %v230, 0.0
        %v346 = vsel %vm330, %v231, 0.0
        %v347 = vsel %vm331, %v232, 0.0
        %v348 = vsel %vm332, %v233, 0.0
        %v349 = vsel %vm333, %v234, 0.0
        %v350 = vsel %vm334, %v235, 0.0
        %v351 = vsel %vm335, %v236, 0.0
        %v352 = vsel %vm336, %v237, 0.0
        %v353 = vsel %vm337, %v238, 0.0
        %v354 = vsel %vm338, %v239, 0.0
        %v355 = vld [vmem:[#allocation2] sm:$0x1]
        %vm356 = vcmask 408576
        %v357 = vsel %vm356, %v339, 0.0
        %v358 = vsel %vm356, %v340, 0.0
        %v359 = vadd.f32 %v357, %v358
        %v360 = vsel %vm356, %v341, 0.0
        %v361 = vadd.f32 %v359, %v360
        %v362 = vsel %vm356, %v342, 0.0
        %v363 = vadd.f32 %v361, %v362
        %v364 = vsel %vm356, %v343, 0.0
        %v365 = vadd.f32 %v363, %v364
        %v366 = vsel %vm356, %v344, 0.0
        %v367 = vadd.f32 %v365, %v366
        %v368 = vsel %vm356, %v345, 0.0
        %v369 = vadd.f32 %v367, %v368
        %v370 = vsel %vm356, %v346, 0.0
        %v371 = vadd.f32 %v369, %v370
        %v372 = vsel %vm356, %v347, 0.0
        %v373 = vadd.f32 %v371, %v372
        %v374 = vsel %vm356, %v348, 0.0
        %v375 = vadd.f32 %v373, %v374
        %v376 = vsel %vm356, %v349, 0.0
        %v377 = vadd.f32 %v375, %v376
        %v378 = vsel %vm356, %v350, 0.0
        %v379 = vadd.f32 %v377, %v378
        %v380 = vsel %vm356, %v351, 0.0
        %v381 = vadd.f32 %v379, %v380
        %v382 = vsel %vm356, %v352, 0.0
        %v383 = vadd.f32 %v381, %v382
        %v384 = vsel %vm356, %v353, 0.0
        %v385 = vadd.f32 %v383, %v384
        %v386 = vsel %vm356, %v354, 0.0
        %v387 = vadd.f32 %v385, %v386
        %v388 = vrot.slane %v387, 4
        %v389 = vadd.f32 %v387, %v388
        %v390 = vrot.slane %v389, 2
        %v391 = vadd.f32 %v389, %v390
        %v392 = vrot.slane %v391, 1
        %v393 = vadd.f32 %v391, %v392
        %v394 = vadd.f32 %v355, %v393
        %vm395 = vcmask 401408
        %396 = vst.msk [vmem:[#allocation2] sm:$0x1] %vm395, %v394
        // Predicated region
        $region33: #{tpu_custom_call.1} parent=27 // pred_check
          %p397 = pneg %p218
        $region34: #{tpu_custom_call.1} parent=27 // pred_check_branch
          %399 = sbr.rel (%p397) target = $region36
        $region35: #{tpu_custom_call.1} parent=27 // pred_region
          %v400 = vld [vmem:[#allocation2] sm:$0x1]
          %v401 = vsel %vm395, %v400, 0.0
          %402 = vadd.xlane.f32.xlu0 %v401
          %v403 = vpop.xlane.xlu0 %402
          %v404 = vmul.f32 %v403, -0.005
          %v405 = vperm.slane %v404, 0
          %406 = vst [vmem:[%s192] sm:$0xff] %v405
        $region36: #{tpu_custom_call.1} parent=27 // pred_fallthru
          _
        %s407 = sand.u32 %s96, 1
        %s408 = scalar_lea.sflag [#allocation4], %s407
        %s409 = sand.u32 %s96, 1
        %s410 = smul.addr %s409, 8
        %s411 = scalar_lea.vmem [#allocation3], %s410
        // Predicated region
        $region37: #{tpu_custom_call.1} parent=27 // pred_check
          %p412 = pneg %p106
        $region38: #{tpu_custom_call.1} parent=27 // pred_check_branch
          %414 = sbr.rel (%p412) target = $region40
        $region39: #{tpu_custom_call.1} parent=27 // pred_region
          %416 = vsyncadd %s408, 0
          %s417 = smul.addr %s20, 8
          %s418 = scalar_lea.hbm %s2, %s417
          %s420 = sshll.u32 %s411, 4
          %s421 = int_to_ptr.vmem [resolvable:$true] %s420
          %s422 = sshll.u32 %s418, 4
          %s423 = int_to_ptr.hbm [resolvable:$true] %s422
          %425 = dma.vmem_to_hbm [thread:$0]  %s421, 128, %s423, %s408
        $region40: #{tpu_custom_call.1} parent=27 // pred_fallthru
          _
      $region28: #{tpu_custom_call.1} parent=5 // pred_fallthru
        _
      %p426 = scmp.le.s32.totalorder 2, %s11
      // Predicated region
      $region41: #{tpu_custom_call.1} parent=5 // pred_check
        %p427 = pneg %p426
      $region42: #{tpu_custom_call.1} parent=5 // pred_check_branch
        %429 = sbr.rel (%p427) target = $region44
      $region43: #{tpu_custom_call.1} parent=5 // pred_region
        %s430 = ssub.s32 %s11, 2
        // Predicated region
        $region45: #{tpu_custom_call.1} parent=43 // pred_check
          %p431 = pneg %p112
        $region46: #{tpu_custom_call.1} parent=43 // pred_check_branch
          %433 = sbr.rel (%p431) target = $region48
        $region47: #{tpu_custom_call.1} parent=43 // pred_region
          %s434 = sand.u32 %s97, 1
          %s435 = scalar_lea.sflag [#allocation4], %s434
          %s436 = sand.u32 %s97, 1
          %s437 = smul.addr %s436, 8
          %s438 = scalar_lea.vmem [#allocation3], %s437
          %440 = dma.done %s435, 128
        $region48: #{tpu_custom_call.1} parent=43 // pred_fallthru
          _
      $region44: #{tpu_custom_call.1} parent=5 // pred_fallthru
        _
    $region6: #{tpu_custom_call.1} parent=1 // loop_footer
      %s15 = sadd.s32 1, %s11
    $region7: #{tpu_custom_call.1} parent=1 // loop_footer_branch
      %10 = sbr.rel target = $region3
    $region8: #{tpu_custom_call.1} parent=1 // loop_exit
      _
    %441 = vsyncpa [#allocation4], 1
    %s442 = scalar_lea.sflag [#allocation4], 1
    %443 = vsyncpa %s442, 1

</llo_original>
